<compile_context>
chip_gen: v5e
topology: v5e:2x2
jax: 0.10.0
libtpu: 0.0.40
codegen_flags: <defaults>
</compile_context>

<pallas_src>
import functools
import math

import jax
import jax.numpy as jnp
from jax.experimental import pallas as pl
from jax.experimental.pallas import tpu as pltpu

_INV_SQRT2 = 1.0 / math.sqrt(2.0)


def _mlm_head_kernel(x_ref, w1_ref, b1_ref, g_ref, beta_ref, w2_ref, b2_ref,
                     o_ref, *, eps):
    # x_ref: (TM, H) bf16 row tile.  Weights are resident bf16 VMEM tiles.
    # dense: Linear(H, H) — bf16 operands, f32 accumulation on the MXU.
    h = jnp.dot(x_ref[...], w1_ref[...],
                preferred_element_type=jnp.float32) + b1_ref[...]

    # gelu (exact, erf-based — matches the PyTorch reference `gelu`)
    h = h * 0.5 * (1.0 + jax.lax.erf(h * _INV_SQRT2))

    # LayerNorm over the hidden axis — two-pass variance (numerically safe,
    # matches nn.LayerNorm).  Stats are strictly per-row, so padded edge rows
    # never contaminate valid rows.
    mean = jnp.mean(h, axis=-1, keepdims=True)
    centered = h - mean
    var = jnp.mean(centered * centered, axis=-1, keepdims=True)
    h = centered * jax.lax.rsqrt(var + eps) * g_ref[...] + beta_ref[...]

    # decoder: Linear(H, 768) with shared bias — bf16 operands, f32 accumulation.
    o_ref[...] = (jnp.dot(h.astype(jnp.bfloat16), w2_ref[...],
                          preferred_element_type=jnp.float32)
                  + b2_ref[...]).astype(o_ref.dtype)


def visual_only_mlm_head(seq_out, params, *, eps=1e-12, tm=512,
                         out_dtype=jnp.bfloat16):
    """seq_out: [B, S, H].  Returns [B, S, 768] in `out_dtype` (bf16 default)."""
    B, S, H = seq_out.shape
    V = params["w2"].shape[1]  # 768
    N = B * S

    # bf16 activation input halves the per-row DMA-in bytes (the binding
    # resource on v6e/v7x at H=V=768).  Weights pre-cast to bf16 too: half the
    # DMA bytes and half the resident VMEM footprint.
    x2d = seq_out.reshape(N, H).astype(jnp.bfloat16)
    w1 = params["w1"].astype(jnp.bfloat16)
    w2 = params["w2"].astype(jnp.bfloat16)

    # Row tile: TM rows per grid step (default 512 — multiple of 256 for the
    # v6e/v7x MXU and big enough to amortize per-step overhead).  Fall back to
    # the full (small) N so the block equals the array dim ((8,128) rule).
    TM = tm if N >= tm else N
    grid = (pl.cdiv(N, TM),)

    out_bytes = jnp.dtype(out_dtype).itemsize
    cost = pl.CostEstimate(
        flops=2 * N * H * (H + V),
        transcendentals=N * H,
        bytes_accessed=(N * H * 2 + N * V * out_bytes        # bf16 x in, logits out
                        + w1.size * 2 + w2.size * 2          # bf16 weights
                        + (3 * H + V) * 4),                  # biases / gamma / beta
    )

    kernel = functools.partial(_mlm_head_kernel, eps=eps)

    def build(single_buffer_weights):
        def const_spec(shape):
            index_map = lambda *_: (0,) * len(shape)
            if single_buffer_weights:
                # Constant block index -> no double-buffering needed; halves
                # the resident weight VMEM (matters most on v7x / v5e budgets).
                return pl.BlockSpec(shape, index_map,
                                    pipeline_mode=pl.Buffered(1))
            return pl.BlockSpec(shape, index_map)

        return pl.pallas_call(
            kernel,
            out_shape=jax.ShapeDtypeStruct((N, V), out_dtype),
            grid_spec=pl.GridSpec(
                grid=grid,
                in_specs=[
                    pl.BlockSpec((TM, H), lambda i: (i, 0)),   # x row tile
                    const_spec((H, H)),                        # dense weight (in, out)
                    const_spec((1, H)),                        # dense bias
                    const_spec((1, H)),                        # LayerNorm gamma
                    const_spec((1, H)),                        # LayerNorm beta
                    const_spec((H, V)),                        # decoder weight (in, out)
                    const_spec((1, V)),                        # decoder (shared) bias
                ],
                out_specs=pl.BlockSpec((TM, V), lambda i: (i, 0)),
            ),
            compiler_params=pltpu.CompilerParams(
                # Row tiles are independent -> shard across TCs on v7x.
                dimension_semantics=("parallel",),
                # Explicit scoped-VMEM budget: 48 MiB is within v7x's 64 MiB
                # physical VMEM and well under v5e/v6e's 128 MiB.
                vmem_limit_bytes=48 * 1024 * 1024),
            cost_estimate=cost,
        )

    args = (x2d, w1, params["b1"], params["gamma"], params["beta"], w2,
            params["b2"])
    try:
        out2d = build(single_buffer_weights=True)(*args)
    except Exception:
        # Fallback for JAX versions where BlockSpec.pipeline_mode / Buffered(1)
        # is unsupported; if the kernel itself is broken this re-raises below.
        out2d = build(single_buffer_weights=False)(*args)

    return out2d.reshape(B, S, V)


def init_params(key, hidden_size, vocab_out=768):
    k1, k2, k3 = jax.random.split(key, 3)
    scale1 = 1.0 / math.sqrt(hidden_size)
    return {
        # stored as (in, out) so the kernel does x @ W directly
        "w1": jax.random.normal(k1, (hidden_size, hidden_size), jnp.float32) * scale1,
        "b1": jax.random.normal(k2, (1, hidden_size), jnp.float32) * 0.02,
        "gamma": jnp.ones((1, hidden_size), jnp.float32),
        "beta": jnp.zeros((1, hidden_size), jnp.float32),
        "w2": jax.random.normal(k3, (hidden_size, vocab_out), jnp.float32) * scale1,
        "b2": jnp.zeros((1, vocab_out), jnp.float32),  # decoder.bias initialized to zeros
    }


def _reference(seq_out, params, eps=1e-12):
    # Mirrors the kernel's GEMM numerics (bf16 operands, f32 accumulation),
    # with the exact erf GELU and two-pass LayerNorm of the PyTorch module.
    w1 = params["w1"].astype(jnp.bfloat16)
    w2 = params["w2"].astype(jnp.bfloat16)
    h = jnp.dot(seq_out.astype(jnp.bfloat16), w1,
                preferred_element_type=jnp.float32) + params["b1"][0]
    h = h * 0.5 * (1.0 + jax.lax.erf(h * _INV_SQRT2))
    mean = jnp.mean(h, axis=-1, keepdims=True)
    var = jnp.mean((h - mean) ** 2, axis=-1, keepdims=True)
    h = (h - mean) * jax.lax.rsqrt(var + eps) * params["gamma"][0] + params["beta"][0]
    return jnp.dot(h.astype(jnp.bfloat16), w2,
                   preferred_element_type=jnp.float32) + params["b2"][0]


if __name__ == "__main__":
    key = jax.random.PRNGKey(0)
    k_x, k_p = jax.random.split(key)

    B, S, H = 2, 8, 32
    seq_out = jax.random.normal(k_x, (B, S, H), jnp.float32)
    params = init_params(k_p, H)

    out = visual_only_mlm_head(seq_out, params)
    out = jax.block_until_ready(out)

    ref = _reference(seq_out, params)
    assert out.shape == (B, S, 768)
    out_f32 = out.astype(jnp.float32)
    # Tolerance covers the intentional bf16 GEMM-operand and bf16-output rounding.
    assert jnp.allclose(out_f32, ref, atol=3e-2, rtol=3e-2), (
        float(jnp.max(jnp.abs(out_f32 - ref))))

    print("KERNEL_OK")
</pallas_src>

<mosaic_0001>
module attributes {stable_mosaic.version = 11 : i64} {
  func.func @_mlm_head_kernel(%arg0: i32, %arg1: memref<16x32xbf16, #tpu.memory_space<vmem>>, %arg2: memref<32x32xbf16, #tpu.memory_space<vmem>>, %arg3: memref<1x32xf32, #tpu.memory_space<vmem>>, %arg4: memref<1x32xf32, #tpu.memory_space<vmem>>, %arg5: memref<1x32xf32, #tpu.memory_space<vmem>>, %arg6: memref<32x768xbf16, #tpu.memory_space<vmem>>, %arg7: memref<1x768xf32, #tpu.memory_space<vmem>>, %arg8: memref<16x768xbf16, #tpu.memory_space<vmem>>) attributes {dimension_semantics = [#tpu.dimension_semantics<parallel>], iteration_bounds = array<i64: 1>, scalar_prefetch = 0 : i64, scratch_operands = 0 : i64, tpu.core_type = #tpu.core_type<tc>, window_params = [{transform_indices = @transform_0, window_bounds = array<i64: 16, 32>}, {pipeline_mode = #tpu.pipeline_mode<synchronous>, transform_indices = @transform_1, window_bounds = array<i64: 32, 32>}, {pipeline_mode = #tpu.pipeline_mode<synchronous>, transform_indices = @transform_2, window_bounds = array<i64: 1, 32>}, {pipeline_mode = #tpu.pipeline_mode<synchronous>, transform_indices = @transform_3, window_bounds = array<i64: 1, 32>}, {pipeline_mode = #tpu.pipeline_mode<synchronous>, transform_indices = @transform_4, window_bounds = array<i64: 1, 32>}, {pipeline_mode = #tpu.pipeline_mode<synchronous>, transform_indices = @transform_5, window_bounds = array<i64: 32, 768>}, {pipeline_mode = #tpu.pipeline_mode<synchronous>, transform_indices = @transform_6, window_bounds = array<i64: 1, 768>}, {transform_indices = @transform_7, window_bounds = array<i64: 16, 768>}]} {
    %c0 = arith.constant 0 : index
    %c0_0 = arith.constant 0 : index
    %0 = vector.load %arg1[%c0, %c0_0] : memref<16x32xbf16, #tpu.memory_space<vmem>>, vector<16x32xbf16>
    %c0_1 = arith.constant 0 : index
    %c0_2 = arith.constant 0 : index
    %1 = vector.load %arg2[%c0_1, %c0_2] : memref<32x32xbf16, #tpu.memory_space<vmem>>, vector<32x32xbf16>
    %cst = arith.constant dense<0.000000e+00> : vector<16x32xf32>
    %2 = tpu.matmul %0, %1, %cst {dimension_numbers = #tpu.dot_dimension_numbers<[1], [0], [0], [1], [0, 0, 1, 1], [], []>} : vector<16x32xbf16>, vector<32x32xbf16>, vector<16x32xf32> -> vector<16x32xf32>
    %c0_3 = arith.constant 0 : index
    %c0_4 = arith.constant 0 : index
    %3 = vector.load %arg3[%c0_3, %c0_4] : memref<1x32xf32, #tpu.memory_space<vmem>>, vector<1x32xf32>
    %4 = vector.broadcast %3 : vector<1x32xf32> to vector<16x32xf32>
    %5 = arith.addf %2, %4 : vector<16x32xf32>
    %cst_5 = arith.constant 5.000000e-01 : f32
    %6 = vector.broadcast %cst_5 : f32 to vector<16x32xf32>
    %7 = arith.mulf %5, %6 : vector<16x32xf32>
    %cst_6 = arith.constant 0.707106769 : f32
    %8 = vector.broadcast %cst_6 : f32 to vector<16x32xf32>
    %9 = arith.mulf %5, %8 : vector<16x32xf32>
    %10 = math.erf %9 : vector<16x32xf32>
    %cst_7 = arith.constant 1.000000e+00 : f32
    %11 = vector.broadcast %cst_7 : f32 to vector<16x32xf32>
    %12 = arith.addf %11, %10 : vector<16x32xf32>
    %13 = arith.mulf %7, %12 : vector<16x32xf32>
    %cst_8 = arith.constant dense<0.000000e+00> : vector<16xf32>
    %14 = vector.multi_reduction <add>, %13, %cst_8 [1] : vector<16x32xf32> to vector<16xf32>
    %15 = vector.shape_cast %14 : vector<16xf32> to vector<16x1xf32>
    %cst_9 = arith.constant 3.200000e+01 : f32
    %16 = vector.broadcast %cst_9 : f32 to vector<16x1xf32>
    %17 = arith.divf %15, %16 : vector<16x1xf32>
    %18 = vector.broadcast %17 : vector<16x1xf32> to vector<16x32xf32>
    %19 = arith.subf %13, %18 : vector<16x32xf32>
    %20 = arith.mulf %19, %19 : vector<16x32xf32>
    %cst_10 = arith.constant dense<0.000000e+00> : vector<16xf32>
    %21 = vector.multi_reduction <add>, %20, %cst_10 [1] : vector<16x32xf32> to vector<16xf32>
    %22 = vector.shape_cast %21 : vector<16xf32> to vector<16x1xf32>
    %cst_11 = arith.constant 3.200000e+01 : f32
    %23 = vector.broadcast %cst_11 : f32 to vector<16x1xf32>
    %24 = arith.divf %22, %23 : vector<16x1xf32>
    %cst_12 = arith.constant 9.99999996E-13 : f32
    %25 = vector.broadcast %cst_12 : f32 to vector<16x1xf32>
    %26 = arith.addf %24, %25 : vector<16x1xf32>
    %27 = math.rsqrt %26 : vector<16x1xf32>
    %28 = vector.broadcast %27 : vector<16x1xf32> to vector<16x32xf32>
    %29 = arith.mulf %19, %28 : vector<16x32xf32>
    %c0_13 = arith.constant 0 : index
    %c0_14 = arith.constant 0 : index
    %30 = vector.load %arg4[%c0_13, %c0_14] : memref<1x32xf32, #tpu.memory_space<vmem>>, vector<1x32xf32>
    %31 = vector.broadcast %30 : vector<1x32xf32> to vector<16x32xf32>
    %32 = arith.mulf %29, %31 : vector<16x32xf32>
    %c0_15 = arith.constant 0 : index
    %c0_16 = arith.constant 0 : index
    %33 = vector.load %arg5[%c0_15, %c0_16] : memref<1x32xf32, #tpu.memory_space<vmem>>, vector<1x32xf32>
    %34 = vector.broadcast %33 : vector<1x32xf32> to vector<16x32xf32>
    %35 = arith.addf %32, %34 : vector<16x32xf32>
    %36 = arith.truncf %35 : vector<16x32xf32> to vector<16x32xbf16>
    %c0_17 = arith.constant 0 : index
    %c0_18 = arith.constant 0 : index
    %37 = vector.load %arg6[%c0_17, %c0_18] : memref<32x768xbf16, #tpu.memory_space<vmem>>, vector<32x768xbf16>
    %cst_19 = arith.constant dense<0.000000e+00> : vector<16x768xf32>
    %38 = tpu.matmul %36, %37, %cst_19 {dimension_numbers = #tpu.dot_dimension_numbers<[1], [0], [0], [1], [0, 0, 1, 1], [], []>} : vector<16x32xbf16>, vector<32x768xbf16>, vector<16x768xf32> -> vector<16x768xf32>
    %c0_20 = arith.constant 0 : index
    %c0_21 = arith.constant 0 : index
    %39 = vector.load %arg7[%c0_20, %c0_21] : memref<1x768xf32, #tpu.memory_space<vmem>>, vector<1x768xf32>
    %40 = vector.broadcast %39 : vector<1x768xf32> to vector<16x768xf32>
    %41 = arith.addf %38, %40 : vector<16x768xf32>
    %42 = arith.truncf %41 : vector<16x768xf32> to vector<16x768xbf16>
    %c0_22 = arith.constant 0 : index
    %c0_23 = arith.constant 0 : index
    %43 = vector.load %arg8[%c0_22, %c0_23] : memref<16x768xbf16, #tpu.memory_space<vmem>>, vector<16x768xbf16>
    tpu.vector_store %arg8[%c0_22, %c0_23], %42 {strides = array<i32>} : memref<16x768xbf16, #tpu.memory_space<vmem>>, vector<16x768xbf16>,
    return
  }
  func.func @transform_0(%arg0: i32) -> (i32, i32) {
    %c0_i32 = arith.constant 0 : i32
    %c0_i32_0 = arith.constant 0 : i32
    return %arg0, %c0_i32 : i32, i32
  }
  func.func @transform_1(%arg0: i32) -> (i32, i32) {
    %c0_i32 = arith.constant 0 : i32
    %c0_i32_0 = arith.constant 0 : i32
    %c0_i32_1 = arith.constant 0 : i32
    return %c0_i32, %c0_i32_0 : i32, i32
  }
  func.func @transform_2(%arg0: i32) -> (i32, i32) {
    %c0_i32 = arith.constant 0 : i32
    %c0_i32_0 = arith.constant 0 : i32
    %c0_i32_1 = arith.constant 0 : i32
    return %c0_i32, %c0_i32_0 : i32, i32
  }
  func.func @transform_3(%arg0: i32) -> (i32, i32) {
    %c0_i32 = arith.constant 0 : i32
    %c0_i32_0 = arith.constant 0 : i32
    %c0_i32_1 = arith.constant 0 : i32
    return %c0_i32, %c0_i32_0 : i32, i32
  }
  func.func @transform_4(%arg0: i32) -> (i32, i32) {
    %c0_i32 = arith.constant 0 : i32
    %c0_i32_0 = arith.constant 0 : i32
    %c0_i32_1 = arith.constant 0 : i32
    return %c0_i32, %c0_i32_0 : i32, i32
  }
  func.func @transform_5(%arg0: i32) -> (i32, i32) {
    %c0_i32 = arith.constant 0 : i32
    %c0_i32_0 = arith.constant 0 : i32
    %c0_i32_1 = arith.constant 0 : i32
    return %c0_i32, %c0_i32_0 : i32, i32
  }
  func.func @transform_6(%arg0: i32) -> (i32, i32) {
    %c0_i32 = arith.constant 0 : i32
    %c0_i32_0 = arith.constant 0 : i32
    %c0_i32_1 = arith.constant 0 : i32
    return %c0_i32, %c0_i32_0 : i32, i32
  }
  func.func @transform_7(%arg0: i32) -> (i32, i32) {
    %c0_i32 = arith.constant 0 : i32
    %c0_i32_0 = arith.constant 0 : i32
    return %arg0, %c0_i32 : i32, i32
  }
}

module attributes {stable_mosaic.version = 11 : i64} {
  func.func @_mlm_head_kernel(%arg0: i32, %arg1: memref<16x32xbf16, #tpu.memory_space<vmem>>, %arg2: memref<32x32xbf16, #tpu.memory_space<vmem>>, %arg3: memref<1x32xf32, #tpu.memory_space<vmem>>, %arg4: memref<1x32xf32, #tpu.memory_space<vmem>>, %arg5: memref<1x32xf32, #tpu.memory_space<vmem>>, %arg6: memref<32x768xbf16, #tpu.memory_space<vmem>>, %arg7: memref<1x768xf32, #tpu.memory_space<vmem>>, %arg8: memref<16x768xbf16, #tpu.memory_space<vmem>>) attributes {dimension_semantics = [#tpu.dimension_semantics<parallel>], iteration_bounds = array<i64: 1>, scalar_prefetch = 0 : i64, scratch_operands = 0 : i64, tpu.core_type = #tpu.core_type<tc>, window_params = [{transform_indices = @transform_0, window_bounds = array<i64: 16, 32>}, {pipeline_mode = #tpu.pipeline_mode<synchronous>, transform_indices = @transform_1, window_bounds = array<i64: 32, 32>}, {pipeline_mode = #tpu.pipeline_mode<synchronous>, transform_indices = @transform_2, window_bounds = array<i64: 1, 32>}, {pipeline_mode = #tpu.pipeline_mode<synchronous>, transform_indices = @transform_3, window_bounds = array<i64: 1, 32>}, {pipeline_mode = #tpu.pipeline_mode<synchronous>, transform_indices = @transform_4, window_bounds = array<i64: 1, 32>}, {pipeline_mode = #tpu.pipeline_mode<synchronous>, transform_indices = @transform_5, window_bounds = array<i64: 32, 768>}, {pipeline_mode = #tpu.pipeline_mode<synchronous>, transform_indices = @transform_6, window_bounds = array<i64: 1, 768>}, {transform_indices = @transform_7, window_bounds = array<i64: 16, 768>}]} {
    %c0 = arith.constant 0 : index
    %c0_0 = arith.constant 0 : index
    %0 = vector.load %arg1[%c0, %c0_0] : memref<16x32xbf16, #tpu.memory_space<vmem>>, vector<16x32xbf16>
    %c0_1 = arith.constant 0 : index
    %c0_2 = arith.constant 0 : index
    %1 = vector.load %arg2[%c0_1, %c0_2] : memref<32x32xbf16, #tpu.memory_space<vmem>>, vector<32x32xbf16>
    %cst = arith.constant dense<0.000000e+00> : vector<16x32xf32>
    %2 = tpu.matmul %0, %1, %cst {dimension_numbers = #tpu.dot_dimension_numbers<[1], [0], [0], [1], [0, 0, 1, 1], [], []>} : vector<16x32xbf16>, vector<32x32xbf16>, vector<16x32xf32> -> vector<16x32xf32>
    %c0_3 = arith.constant 0 : index
    %c0_4 = arith.constant 0 : index
    %3 = vector.load %arg3[%c0_3, %c0_4] : memref<1x32xf32, #tpu.memory_space<vmem>>, vector<1x32xf32>
    %4 = vector.broadcast %3 : vector<1x32xf32> to vector<16x32xf32>
    %5 = arith.addf %2, %4 : vector<16x32xf32>
    %cst_5 = arith.constant 5.000000e-01 : f32
    %6 = vector.broadcast %cst_5 : f32 to vector<16x32xf32>
    %7 = arith.mulf %5, %6 : vector<16x32xf32>
    %cst_6 = arith.constant 0.707106769 : f32
    %8 = vector.broadcast %cst_6 : f32 to vector<16x32xf32>
    %9 = arith.mulf %5, %8 : vector<16x32xf32>
    %10 = math.erf %9 : vector<16x32xf32>
    %cst_7 = arith.constant 1.000000e+00 : f32
    %11 = vector.broadcast %cst_7 : f32 to vector<16x32xf32>
    %12 = arith.addf %11, %10 : vector<16x32xf32>
    %13 = arith.mulf %7, %12 : vector<16x32xf32>
    %cst_8 = arith.constant dense<0.000000e+00> : vector<16xf32>
    %14 = vector.multi_reduction <add>, %13, %cst_8 [1] : vector<16x32xf32> to vector<16xf32>
    %15 = vector.shape_cast %14 : vector<16xf32> to vector<16x1xf32>
    %cst_9 = arith.constant 3.200000e+01 : f32
    %16 = vector.broadcast %cst_9 : f32 to vector<16x1xf32>
    %17 = arith.divf %15, %16 : vector<16x1xf32>
    %18 = vector.broadcast %17 : vector<16x1xf32> to vector<16x32xf32>
    %19 = arith.subf %13, %18 : vector<16x32xf32>
    %20 = arith.mulf %19, %19 : vector<16x32xf32>
    %cst_10 = arith.constant dense<0.000000e+00> : vector<16xf32>
    %21 = vector.multi_reduction <add>, %20, %cst_10 [1] : vector<16x32xf32> to vector<16xf32>
    %22 = vector.shape_cast %21 : vector<16xf32> to vector<16x1xf32>
    %cst_11 = arith.constant 3.200000e+01 : f32
    %23 = vector.broadcast %cst_11 : f32 to vector<16x1xf32>
    %24 = arith.divf %22, %23 : vector<16x1xf32>
    %cst_12 = arith.constant 9.99999996E-13 : f32
    %25 = vector.broadcast %cst_12 : f32 to vector<16x1xf32>
    %26 = arith.addf %24, %25 : vector<16x1xf32>
    %27 = math.rsqrt %26 : vector<16x1xf32>
    %28 = vector.broadcast %27 : vector<16x1xf32> to vector<16x32xf32>
    %29 = arith.mulf %19, %28 : vector<16x32xf32>
    %c0_13 = arith.constant 0 : index
    %c0_14 = arith.constant 0 : index
    %30 = vector.load %arg4[%c0_13, %c0_14] : memref<1x32xf32, #tpu.memory_space<vmem>>, vector<1x32xf32>
    %31 = vector.broadcast %30 : vector<1x32xf32> to vector<16x32xf32>
    %32 = arith.mulf %29, %31 : vector<16x32xf32>
    %c0_15 = arith.constant 0 : index
    %c0_16 = arith.constant 0 : index
    %33 = vector.load %arg5[%c0_15, %c0_16] : memref<1x32xf32, #tpu.memory_space<vmem>>, vector<1x32xf32>
    %34 = vector.broadcast %33 : vector<1x32xf32> to vector<16x32xf32>
    %35 = arith.addf %32, %34 : vector<16x32xf32>
    %36 = arith.truncf %35 : vector<16x32xf32> to vector<16x32xbf16>
    %c0_17 = arith.constant 0 : index
    %c0_18 = arith.constant 0 : index
    %37 = vector.load %arg6[%c0_17, %c0_18] : memref<32x768xbf16, #tpu.memory_space<vmem>>, vector<32x768xbf16>
    %cst_19 = arith.constant dense<0.000000e+00> : vector<16x768xf32>
    %38 = tpu.matmul %36, %37, %cst_19 {dimension_numbers = #tpu.dot_dimension_numbers<[1], [0], [0], [1], [0, 0, 1, 1], [], []>} : vector<16x32xbf16>, vector<32x768xbf16>, vector<16x768xf32> -> vector<16x768xf32>
    %c0_20 = arith.constant 0 : index
    %c0_21 = arith.constant 0 : index
    %39 = vector.load %arg7[%c0_20, %c0_21] : memref<1x768xf32, #tpu.memory_space<vmem>>, vector<1x768xf32>
    %40 = vector.broadcast %39 : vector<1x768xf32> to vector<16x768xf32>
    %41 = arith.addf %38, %40 : vector<16x768xf32>
    %42 = arith.truncf %41 : vector<16x768xf32> to vector<16x768xbf16>
    %c0_22 = arith.constant 0 : index
    %c0_23 = arith.constant 0 : index
    %43 = vector.load %arg8[%c0_22, %c0_23] : memref<16x768xbf16, #tpu.memory_space<vmem>>, vector<16x768xbf16>
    tpu.vector_store %arg8[%c0_22, %c0_23], %42 {strides = array<i32>} : memref<16x768xbf16, #tpu.memory_space<vmem>>, vector<16x768xbf16>,
    return
  }
  func.func @transform_0(%arg0: i32) -> (i32, i32) {
    %c0_i32 = arith.constant 0 : i32
    %c0_i32_0 = arith.constant 0 : i32
    return %arg0, %c0_i32 : i32, i32
  }
  func.func @transform_1(%arg0: i32) -> (i32, i32) {
    %c0_i32 = arith.constant 0 : i32
    %c0_i32_0 = arith.constant 0 : i32
    %c0_i32_1 = arith.constant 0 : i32
    return %c0_i32, %c0_i32_0 : i32, i32
  }
  func.func @transform_2(%arg0: i32) -> (i32, i32) {
    %c0_i32 = arith.constant 0 : i32
    %c0_i32_0 = arith.constant 0 : i32
    %c0_i32_1 = arith.constant 0 : i32
    return %c0_i32, %c0_i32_0 : i32, i32
  }
  func.func @transform_3(%arg0: i32) -> (i32, i32) {
    %c0_i32 = arith.constant 0 : i32
    %c0_i32_0 = arith.constant 0 : i32
    %c0_i32_1 = arith.constant 0 : i32
    return %c0_i32, %c0_i32_0 : i32, i32
  }
  func.func @transform_4(%arg0: i32) -> (i32, i32) {
    %c0_i32 = arith.constant 0 : i32
    %c0_i32_0 = arith.constant 0 : i32
    %c0_i32_1 = arith.constant 0 : i32
    return %c0_i32, %c0_i32_0 : i32, i32
  }
  func.func @transform_5(%arg0: i32) -> (i32, i32) {
    %c0_i32 = arith.constant 0 : i32
    %c0_i32_0 = arith.constant 0 : i32
    %c0_i32_1 = arith.constant 0 : i32
    return %c0_i32, %c0_i32_0 : i32, i32
  }
  func.func @transform_6(%arg0: i32) -> (i32, i32) {
    %c0_i32 = arith.constant 0 : i32
    %c0_i32_0 = arith.constant 0 : i32
    %c0_i32_1 = arith.constant 0 : i32
    return %c0_i32, %c0_i32_0 : i32, i32
  }
  func.func @transform_7(%arg0: i32) -> (i32, i32) {
    %c0_i32 = arith.constant 0 : i32
    %c0_i32_0 = arith.constant 0 : i32
    return %arg0, %c0_i32 : i32, i32
  }
}

</mosaic_0001>

<llo_original>
// kernel: tpu_custom_call.1
$region0: #{tpu_custom_call.1}
  #allocation0 [shape = 'u32[]', space=smem, size = 0x4, offset = 0x4, fixed_abs, tag = 'smem constant byte address 0x4 - core index']
  #allocation1 [shape = 'u32[72,128]{1,0:T(1,128)}', space=vmem, size = 0x9000, scoped, tag = 'internal scratch']
  %s0 = inlined_call_operand.hbm [shape: bf16[16,32], index: 0, kind: input, shape index: {}]
  %s1 = inlined_call_operand.hbm [shape: bf16[32,32], index: 1, kind: input, shape index: {}]
  %s2 = inlined_call_operand.vmem [shape: f32[1,32], index: 2, kind: input, shape index: {}]
  %s3 = inlined_call_operand.vmem [shape: f32[1,32], index: 3, kind: input, shape index: {}]
  %s4 = inlined_call_operand.vmem [shape: f32[1,32], index: 4, kind: input, shape index: {}]
  %s5 = inlined_call_operand.hbm [shape: bf16[32,768], index: 5, kind: input, shape index: {}]
  %s6 = inlined_call_operand.hbm [shape: f32[1,768], index: 6, kind: input, shape index: {}]
  %s7 = inlined_call_operand.hbm [shape: bf16[16,768], index: 7, kind: output, shape index: {}]
  %s8 = sld [smem:[#allocation0]]
  $region54: #{tpu_custom_call.1} parent=0
    _
  %s10 = ssub.s32 1, %s8
  %s11 = scalar_select 0, %s10, %s8
  $region1: #{tpu_custom_call.1} parent=0
    #allocation2 [shape = 'u8[4096]{0}', space=vmem, size = 0x1000, scoped, tag = 'input window, operand 0, single buffered']
    #allocation3 [shape = 's32[1]{0}', space=sflag, size = 0x4, scoped, tag = 'scoped memory for tpu_custom_call.1']
    #allocation4 [shape = 's32[1]{0}', space=sflag, size = 0x4, scoped, tag = 'scoped memory for tpu_custom_call.1']
    #allocation5 [shape = 'u8[8192]{0}', space=vmem, size = 0x2000, scoped, tag = 'input window, operand 1, single buffered']
    #allocation6 [shape = 's32[1]{0}', space=sflag, size = 0x4, scoped, tag = 'scoped memory for tpu_custom_call.1']
    #allocation7 [shape = 'u8[49152]{0}', space=vmem, size = 0xc000, scoped, tag = 'input window, operand 5, single buffered']
    #allocation8 [shape = 'u8[3072]{0}', space=vmem, size = 0xc00, scoped, tag = 'input window, operand 6, single buffered']
    #allocation9 [shape = 's32[1]{0}', space=sflag, size = 0x4, scoped, tag = 'scoped memory for tpu_custom_call.1']
    #allocation10 [shape = 'u8[24576]{0}', space=vmem, size = 0x6000, scoped, tag = 'output window, operand 0, single buffered']
    %12 = vsyncpa [#allocation3], 0
    %13 = vsyncpa [#allocation6], 0
    %14 = vsyncpa [#allocation9], 0
    %15 = vsyncpa [#allocation4], 0
    // Predicated region
    $region2: #{tpu_custom_call.1} parent=1 // pred_check
      _
    $region3: #{tpu_custom_call.1} parent=1 // pred_check_branch
      %17 = sbr.rel (0) target = $region5
    $region4: #{tpu_custom_call.1} parent=1 // pred_region
      %19 = vsyncadd [#allocation3], 0
      %s20 = sshll.u32 %s0, 4
      %s21 = int_to_ptr.hbm [resolvable:$true] %s20
      %s22 = sshll.u32 [#allocation2], 4
      %s23 = int_to_ptr.vmem [resolvable:$true] %s22
      %28 = dma.hbm_to_vmem [thread:$0]  %s21, 128, %s23, [#allocation3], 64, 64, 4
    $region5: #{tpu_custom_call.1} parent=1 // pred_fallthru
      _
    // Predicated region
    $region6: #{tpu_custom_call.1} parent=1 // pred_check
      _
    $region7: #{tpu_custom_call.1} parent=1 // pred_check_branch
      %30 = sbr.rel (0) target = $region9
    $region8: #{tpu_custom_call.1} parent=1 // pred_region
      %32 = vsyncadd [#allocation6], 0
      %s33 = sshll.u32 %s1, 4
      %s34 = int_to_ptr.hbm [resolvable:$true] %s33
      %s35 = sshll.u32 [#allocation5], 4
      %s36 = int_to_ptr.vmem [resolvable:$true] %s35
      %41 = dma.hbm_to_vmem [thread:$0]  %s34, 256, %s36, [#allocation6], 64, 64, 4
    $region9: #{tpu_custom_call.1} parent=1 // pred_fallthru
      _
    // Predicated region
    $region10: #{tpu_custom_call.1} parent=1 // pred_check
      _
    $region11: #{tpu_custom_call.1} parent=1 // pred_check_branch
      %43 = sbr.rel (0) target = $region13
    $region12: #{tpu_custom_call.1} parent=1 // pred_region
      _
    $region13: #{tpu_custom_call.1} parent=1 // pred_fallthru
      _
    // Predicated region
    $region14: #{tpu_custom_call.1} parent=1 // pred_check
      _
    $region15: #{tpu_custom_call.1} parent=1 // pred_check_branch
      %45 = sbr.rel (0) target = $region17
    $region16: #{tpu_custom_call.1} parent=1 // pred_region
      _
    $region17: #{tpu_custom_call.1} parent=1 // pred_fallthru
      _
    // Predicated region
    $region18: #{tpu_custom_call.1} parent=1 // pred_check
      _
    $region19: #{tpu_custom_call.1} parent=1 // pred_check_branch
      %47 = sbr.rel (0) target = $region21
    $region20: #{tpu_custom_call.1} parent=1 // pred_region
      _
    $region21: #{tpu_custom_call.1} parent=1 // pred_fallthru
      _
    // Predicated region
    $region22: #{tpu_custom_call.1} parent=1 // pred_check
      _
    $region23: #{tpu_custom_call.1} parent=1 // pred_check_branch
      %49 = sbr.rel (0) target = $region25
    $region24: #{tpu_custom_call.1} parent=1 // pred_region
      %51 = vsyncadd [#allocation6], 0
      %s52 = sshll.u32 %s5, 4
      %s53 = int_to_ptr.hbm [resolvable:$true] %s52
      %s54 = sshll.u32 [#allocation7], 4
      %s55 = int_to_ptr.vmem [resolvable:$true] %s54
      %60 = dma.hbm_to_vmem [thread:$0]  %s53, 1536, %s55, [#allocation6], 384, 384, 24
    $region25: #{tpu_custom_call.1} parent=1 // pred_fallthru
      _
    // Predicated region
    $region26: #{tpu_custom_call.1} parent=1 // pred_check
      _
    $region27: #{tpu_custom_call.1} parent=1 // pred_check_branch
      %62 = sbr.rel (0) target = $region29
    $region28: #{tpu_custom_call.1} parent=1 // pred_region
      %64 = vsyncadd [#allocation9], 0
      %s66 = sshll.u32 %s6, 4
      %s67 = int_to_ptr.hbm [resolvable:$true] %s66
      %s68 = sshll.u32 [#allocation8], 4
      %s69 = int_to_ptr.vmem [resolvable:$true] %s68
      %71 = dma.hbm_to_vmem [thread:$0]  %s67, 96, %s69, [#allocation9]
    $region29: #{tpu_custom_call.1} parent=1 // pred_fallthru
      _
    // Predicated region
    $region30: #{tpu_custom_call.1} parent=1 // pred_check
      _
    $region31: #{tpu_custom_call.1} parent=1 // pred_check_branch
      %73 = sbr.rel (0) target = $region33
    $region32: #{tpu_custom_call.1} parent=1 // pred_region
      %75 = dma.done [#allocation3], 128
    $region33: #{tpu_custom_call.1} parent=1 // pred_fallthru
      _
    // Predicated region
    $region34: #{tpu_custom_call.1} parent=1 // pred_check
      _
    $region35: #{tpu_custom_call.1} parent=1 // pred_check_branch
      %77 = sbr.rel (0) target = $region37
    $region36: #{tpu_custom_call.1} parent=1 // pred_region
      %79 = dma.done [#allocation6], 256
    $region37: #{tpu_custom_call.1} parent=1 // pred_fallthru
      _
    // Predicated region
    $region38: #{tpu_custom_call.1} parent=1 // pred_check
      _
    $region39: #{tpu_custom_call.1} parent=1 // pred_check_branch
      %81 = sbr.rel (0) target = $region41
    $region40: #{tpu_custom_call.1} parent=1 // pred_region
      %83 = dma.done [#allocation6], 1536
    $region41: #{tpu_custom_call.1} parent=1 // pred_fallthru
      _
    // Predicated region
    $region42: #{tpu_custom_call.1} parent=1 // pred_check
      _
    $region43: #{tpu_custom_call.1} parent=1 // pred_check_branch
      %85 = sbr.rel (0) target = $region45
    $region44: #{tpu_custom_call.1} parent=1 // pred_region
      %87 = dma.done [#allocation9], 96
    $region45: #{tpu_custom_call.1} parent=1 // pred_fallthru
      _
    %v89 = vld [vmem:[#allocation2] sm:$0xf]
    %v90 = vld [vmem:[#allocation2 + $0x4] sm:$0xf]
    %v91 = vld [vmem:[#allocation5] sm:$0xf]
    %v92 = vld [vmem:[#allocation5 + $0x4] sm:$0xf]
    %v93 = vld [vmem:[#allocation5 + $0x8] sm:$0xf]
    %v94 = vld [vmem:[#allocation5 + $0xc] sm:$0xf]
    %v95 = vld [vmem:[%s2] sm:$0x1]
    %v97 = vperm.slane %v95, 0
    %v101 = vunpack.c.l.b16 %v89
    %v102 = vunpack.c.l.b16 %v90
    %v103 = vpack.c.b16 %v102, %v101
    %v108 = vunpack.c.l.b16 %v91
    %v109 = vunpack.c.l.b16 %v92
    %v110 = vunpack.c.l.b16 %v93
    %v111 = vunpack.c.l.b16 %v94
    %v112 = vpack.c.b16 %v109, %v108
    %v113 = vpack.c.b16 %v111, %v110
    %vm116 = vcmask 261120
    %v118 = vsel %vm116, %v103, 0
    %120 = vmatpush.bf16.msra.mxu0 0
    %121 = vmatpush.bf16.msra.mxu0 0
    %122 = vmatpush.bf16.msra.mxu0 0
    %123 = vmatpush.bf16.msra.mxu0 0
    %124 = vmatpush.bf16.msra.mxu0 0
    %125 = vmatpush.bf16.msra.mxu0 0
    %126 = vmatpush.bf16.msra.mxu0 %v113
    %127 = vmatpush.bf16.msra.mxu0 %v112
    %128 = vmatmul.bf16.gmra.mxu0 %v118
    %v129 = vpop.f32.mrf.mxu0
    %v130 = vadd.f32 %v97, %v129
    %v131 = vpop.f32.mrf.mxu0
    %v132 = vadd.f32 %v97, %v131
    %133 = vdwg.mxu0
    %v134 = vmul.f32 %v130, 0.5
    %v135 = vmul.f32 %v132, 0.5
    %v136 = vmul.f32 %v130, 0.70710677
    %v137 = vmul.f32 %v132, 0.70710677
    %v138 = vmul.f32 %v136, %v136
    %v139 = vmin.f32 16.0, %v138
    %v140 = vmul.f32 %v139, 2.1237322e-06
    %v141 = vadd.f32 %v140, 0.00028619796
    %v142 = vmul.f32 %v139, %v141
    %v143 = vadd.f32 %v142, 0.0036580483
    %v144 = vmul.f32 %v139, %v143
    %v145 = vadd.f32 %v144, 0.05243302
    %v146 = vmul.f32 %v139, %v145
    %v147 = vadd.f32 %v146, 0.18741608
    %v148 = vmul.f32 %v139, %v147
    %v149 = vadd.f32 %v148, 1.1283791
    %v150 = vmul.f32 %v136, %v149
    %v151 = vmul.f32 %v139, 3.8918573e-05
    %v152 = vadd.f32 %v151, 0.001143296
    %v153 = vmul.f32 %v139, %v152
    %v154 = vadd.f32 %v153, 0.014752088
    %v155 = vmul.f32 %v139, %v154
    %v156 = vadd.f32 %v155, 0.112945676
    %v157 = vmul.f32 %v139, %v156
    %v158 = vadd.f32 %v157, 0.4994258
    %v159 = vmul.f32 %v139, %v158
    %v160 = vadd.f32 %v159, 1.0
    %v161 = vrcp.pop %v160
    %v162 = vmul.f32 %v160, %v161
    %v163 = vsub.f32 1.0, %v162
    %v164 = vmul.f32 %v161, %v163
    %v165 = vadd.f32 %v161, %v164
    %vm166 = vweird.f32 %v160
    %vm167 = vweird.f32 %v161
    %vm168 = vmor %vm166, %vm167
    %v169 = vsel %vm168, %v161, %v165
    %v170 = vand.u32 2147483647, %v160
    %vm171 = vcmp.eq.f32.partialorder %v170, 8.507059e+37
    %v172 = vand.u32 %v160, 2147483648
    %v173 = vor.u32 1.1754944e-38, %v172
    %v174 = vsel %vm171, %v173, %v169
    %v175 = vmul.f32 %v150, %v174
    %v176 = vmin.f32 %v175, 1.0
    %v177 = vmax.f32 %v176, -1.0
    %v178 = vmul.f32 %v137, %v137
    %v179 = vmin.f32 16.0, %v178
    %v180 = vmul.f32 %v179, 2.1237322e-06
    %v181 = vadd.f32 %v180, 0.00028619796
    %v182 = vmul.f32 %v179, %v181
    %v183 = vadd.f32 %v182, 0.0036580483
    %v184 = vmul.f32 %v179, %v183
    %v185 = vadd.f32 %v184, 0.05243302
    %v186 = vmul.f32 %v179, %v185
    %v187 = vadd.f32 %v186, 0.18741608
    %v188 = vmul.f32 %v179, %v187
    %v189 = vadd.f32 %v188, 1.1283791
    %v190 = vmul.f32 %v137, %v189
    %v191 = vmul.f32 %v179, 3.8918573e-05
    %v192 = vadd.f32 %v191, 0.001143296
    %v193 = vmul.f32 %v179, %v192
    %v194 = vadd.f32 %v193, 0.014752088
    %v195 = vmul.f32 %v179, %v194
    %v196 = vadd.f32 %v195, 0.112945676
    %v197 = vmul.f32 %v179, %v196
    %v198 = vadd.f32 %v197, 0.4994258
    %v199 = vmul.f32 %v179, %v198
    %v200 = vadd.f32 %v199, 1.0
    %v201 = vrcp.pop %v200
    %v202 = vmul.f32 %v200, %v201
    %v203 = vsub.f32 1.0, %v202
    %v204 = vmul.f32 %v201, %v203
    %v205 = vadd.f32 %v201, %v204
    %vm206 = vweird.f32 %v200
    %vm207 = vweird.f32 %v201
    %vm208 = vmor %vm206, %vm207
    %v209 = vsel %vm208, %v201, %v205
    %v210 = vand.u32 2147483647, %v200
    %vm211 = vcmp.eq.f32.partialorder %v210, 8.507059e+37
    %v212 = vand.u32 %v200, 2147483648
    %v213 = vor.u32 1.1754944e-38, %v212
    %v214 = vsel %vm211, %v213, %v209
    %v215 = vmul.f32 %v190, %v214
    %v216 = vmin.f32 %v215, 1.0
    %v217 = vmax.f32 %v216, -1.0
    %v218 = vadd.f32 %v177, 1.0
    %v219 = vadd.f32 %v217, 1.0
    %v220 = vmul.f32 %v134, %v218
    %v221 = vmul.f32 %v135, %v219
    %v222 = vsel %vm116, %v220, 0.0
    %223 = vadd.xlane.f32.xlu0 %v222
    %v224 = vpop.xlane.xlu0 %223
    %v225 = vsel %vm116, %v221, 0.0
    %226 = vadd.xlane.f32.xlu0 %v225
    %v227 = vpop.xlane.xlu0 %226
    %v228 = vrcp.pop 32.0
    %v229 = vmul.f32 32.0, %v228
    %v230 = vsub.f32 1.0, %v229
    %v231 = vmul.f32 %v228, %v230
    %v232 = vadd.f32 %v228, %v231
    %vm233 = vweird.f32 %v228
    %v234 = vsel %vm233, %v228, %v232
    %v235 = vmul.f32 %v224, %v234
    %v236 = vmul.f32 %v227, %v234
    %v237 = vsub.f32 %v220, %v235
    %v238 = vsub.f32 %v221, %v236
    %v239 = vmul.f32 %v237, %v237
    %v240 = vmul.f32 %v238, %v238
    %v241 = vsel %vm116, %v239, 0.0
    %242 = vadd.xlane.f32.xlu0 %v241
    %v243 = vpop.xlane.xlu0 %242
    %v244 = vsel %vm116, %v240, 0.0
    %245 = vadd.xlane.f32.xlu0 %v244
    %v246 = vpop.xlane.xlu0 %245
    %v247 = vmul.f32 %v243, %v234
    %v248 = vmul.f32 %v246, %v234
    %v249 = vadd.f32 %v247, 1e-12
    %v250 = vadd.f32 %v248, 1e-12
    %v251 = vrsqrt.pop %v249
    %v252 = vmul.f32 %v251, %v249
    %v253 = vmul.f32 %v252, %v251
    %v254 = vmul.f32 0.5, %v253
    %v255 = vsub.f32 1.5, %v254
    %v256 = vmul.f32 %v251, %v255
    %vm257 = vweird.f32 %v249
    %vm258 = vweird.f32 %v251
    %vm259 = vmor %vm257, %vm258
    %v260 = vsel %vm259, %v251, %v256
    %v261 = vrsqrt.pop %v250
    %v262 = vmul.f32 %v261, %v250
    %v263 = vmul.f32 %v262, %v261
    %v264 = vmul.f32 0.5, %v263
    %v265 = vsub.f32 1.5, %v264
    %v266 = vmul.f32 %v261, %v265
    %vm267 = vweird.f32 %v250
    %vm268 = vweird.f32 %v261
    %vm269 = vmor %vm267, %vm268
    %v270 = vsel %vm269, %v261, %v266
    %v271 = vmul.f32 %v237, %v260
    %v272 = vmul.f32 %v238, %v270
    %v273 = vld [vmem:[%s3] sm:$0x1]
    %v275 = vperm.slane %v273, 0
    %v277 = vmul.f32 %v271, %v275
    %v278 = vmul.f32 %v272, %v275
    %v279 = vld [vmem:[%s4] sm:$0x1]
    %v281 = vperm.slane %v279, 0
    %v283 = vadd.f32 %v277, %v281
    %v284 = vadd.f32 %v278, %v281
    %v285 = vpack.c.bf16 %v284, %v283
    %v286 = vld [vmem:[#allocation7] sm:$0xff]
    %v287 = vld [vmem:[#allocation7 + $0x8] sm:$0xff]
    %v288 = vld [vmem:[#allocation7 + $0x10] sm:$0xff]
    %v289 = vld [vmem:[#allocation7 + $0x18] sm:$0xff]
    %v290 = vld [vmem:[#allocation7 + $0x20] sm:$0xff]
    %v291 = vld [vmem:[#allocation7 + $0x28] sm:$0xff]
    %v292 = vld [vmem:[#allocation7 + $0x30] sm:$0xff]
    %v293 = vld [vmem:[#allocation7 + $0x38] sm:$0xff]
    %v294 = vld [vmem:[#allocation7 + $0x40] sm:$0xff]
    %v295 = vld [vmem:[#allocation7 + $0x48] sm:$0xff]
    %v296 = vld [vmem:[#allocation7 + $0x50] sm:$0xff]
    %v297 = vld [vmem:[#allocation7 + $0x58] sm:$0xff]
    %v298 = vld [vmem:[#allocation8] sm:$0x3f]
    %v300 = vperm.slane %v298, 0
    %v301 = vperm.slane %v298, 1
    %v302 = vperm.slane %v298, 2
    %v303 = vperm.slane %v298, 3
    %v304 = vperm.slane %v298, 4
    %v305 = vperm.slane %v298, 5
    %v324 = vunpack.c.l.b16 %v286
    %v325 = vunpack.c.h.b16 %v286
    %v326 = vunpack.c.l.b16 %v287
    %v327 = vunpack.c.h.b16 %v287
    %v328 = vunpack.c.l.b16 %v288
    %v329 = vunpack.c.h.b16 %v288
    %v330 = vunpack.c.l.b16 %v289
    %v331 = vunpack.c.h.b16 %v289
    %v332 = vunpack.c.l.b16 %v290
    %v333 = vunpack.c.h.b16 %v290
    %v334 = vunpack.c.l.b16 %v291
    %v335 = vunpack.c.h.b16 %v291
    %v336 = vunpack.c.l.b16 %v292
    %v337 = vunpack.c.h.b16 %v292
    %v338 = vunpack.c.l.b16 %v293
    %v339 = vunpack.c.h.b16 %v293
    %v340 = vunpack.c.l.b16 %v294
    %v341 = vunpack.c.h.b16 %v294
    %v342 = vunpack.c.l.b16 %v295
    %v343 = vunpack.c.h.b16 %v295
    %v344 = vunpack.c.l.b16 %v296
    %v345 = vunpack.c.h.b16 %v296
    %v346 = vunpack.c.l.b16 %v297
    %v347 = vunpack.c.h.b16 %v297
    %v348 = vpack.c.b16 %v330, %v324
    %v349 = vpack.c.b16 %v331, %v325
    %v350 = vpack.c.b16 %v332, %v326
    %v351 = vpack.c.b16 %v333, %v327
    %v352 = vpack.c.b16 %v334, %v328
    %v353 = vpack.c.b16 %v335, %v329
    %v354 = vpack.c.b16 %v342, %v336
    %v355 = vpack.c.b16 %v343, %v337
    %v356 = vpack.c.b16 %v344, %v338
    %v357 = vpack.c.b16 %v345, %v339
    %v358 = vpack.c.b16 %v346, %v340
    %v359 = vpack.c.b16 %v347, %v341
    %v373 = vsel %vm116, %v285, 0
    %375 = vmatpush.bf16.msra.mxu0 0
    %376 = vmatpush.bf16.msra.mxu0 0
    %377 = vmatpush.bf16.msra.mxu0 0
    %378 = vmatpush.bf16.msra.mxu0 0
    %379 = vmatpush.bf16.msra.mxu0 0
    %380 = vmatpush.bf16.msra.mxu0 0
    %381 = vmatpush.bf16.msra.mxu0 %v354
    %382 = vmatpush.bf16.msra.mxu0 %v348
    %383 = vmatmul.bf16.gmra.mxu0 %v373
    %v384 = vpop.f32.mrf.mxu0
    %v385 = vadd.f32 %v300, %v384
    %v386 = vpop.f32.mrf.mxu0
    %v387 = vadd.f32 %v300, %v386
    %388 = vdwg.mxu0
    %389 = vmatpush.bf16.msra.mxu0 0
    %390 = vmatpush.bf16.msra.mxu0 0
    %391 = vmatpush.bf16.msra.mxu0 0
    %392 = vmatpush.bf16.msra.mxu0 0
    %393 = vmatpush.bf16.msra.mxu0 0
    %394 = vmatpush.bf16.msra.mxu0 0
    %395 = vmatpush.bf16.msra.mxu0 %v355
    %396 = vmatpush.bf16.msra.mxu0 %v349
    %397 = vmatmul.bf16.gmra.mxu0 %v373
    %v398 = vpop.f32.mrf.mxu0
    %v399 = vadd.f32 %v301, %v398
    %v400 = vpop.f32.mrf.mxu0
    %v401 = vadd.f32 %v301, %v400
    %402 = vdwg.mxu0
    %403 = vmatpush.bf16.msra.mxu0 0
    %404 = vmatpush.bf16.msra.mxu0 0
    %405 = vmatpush.bf16.msra.mxu0 0
    %406 = vmatpush.bf16.msra.mxu0 0
    %407 = vmatpush.bf16.msra.mxu0 0
    %408 = vmatpush.bf16.msra.mxu0 0
    %409 = vmatpush.bf16.msra.mxu0 %v356
    %410 = vmatpush.bf16.msra.mxu0 %v350
    %411 = vmatmul.bf16.gmra.mxu0 %v373
    %v412 = vpop.f32.mrf.mxu0
    %v413 = vadd.f32 %v302, %v412
    %v414 = vpop.f32.mrf.mxu0
    %v415 = vadd.f32 %v302, %v414
    %416 = vdwg.mxu0
    %417 = vmatpush.bf16.msra.mxu0 0
    %418 = vmatpush.bf16.msra.mxu0 0
    %419 = vmatpush.bf16.msra.mxu0 0
    %420 = vmatpush.bf16.msra.mxu0 0
    %421 = vmatpush.bf16.msra.mxu0 0
    %422 = vmatpush.bf16.msra.mxu0 0
    %423 = vmatpush.bf16.msra.mxu0 %v357
    %424 = vmatpush.bf16.msra.mxu0 %v351
    %425 = vmatmul.bf16.gmra.mxu0 %v373
    %v426 = vpop.f32.mrf.mxu0
    %v427 = vadd.f32 %v303, %v426
    %v428 = vpop.f32.mrf.mxu0
    %v429 = vadd.f32 %v303, %v428
    %430 = vdwg.mxu0
    %431 = vmatpush.bf16.msra.mxu0 0
    %432 = vmatpush.bf16.msra.mxu0 0
    %433 = vmatpush.bf16.msra.mxu0 0
    %434 = vmatpush.bf16.msra.mxu0 0
    %435 = vmatpush.bf16.msra.mxu0 0
    %436 = vmatpush.bf16.msra.mxu0 0
    %437 = vmatpush.bf16.msra.mxu0 %v358
    %438 = vmatpush.bf16.msra.mxu0 %v352
    %439 = vmatmul.bf16.gmra.mxu0 %v373
    %v440 = vpop.f32.mrf.mxu0
    %v441 = vadd.f32 %v304, %v440
    %v442 = vpop.f32.mrf.mxu0
    %v443 = vadd.f32 %v304, %v442
    %444 = vdwg.mxu0
    %445 = vmatpush.bf16.msra.mxu0 0
    %446 = vmatpush.bf16.msra.mxu0 0
    %447 = vmatpush.bf16.msra.mxu0 0
    %448 = vmatpush.bf16.msra.mxu0 0
    %449 = vmatpush.bf16.msra.mxu0 0
    %450 = vmatpush.bf16.msra.mxu0 0
    %451 = vmatpush.bf16.msra.mxu0 %v359
    %452 = vmatpush.bf16.msra.mxu0 %v353
    %453 = vmatmul.bf16.gmra.mxu0 %v373
    %v454 = vpop.f32.mrf.mxu0
    %v455 = vadd.f32 %v305, %v454
    %v456 = vpop.f32.mrf.mxu0
    %v457 = vadd.f32 %v305, %v456
    %458 = vdwg.mxu0
    %v459 = vpack.c.bf16 %v399, %v385
    %v460 = vpack.c.bf16 %v427, %v413
    %v461 = vpack.c.bf16 %v455, %v441
    %v462 = vpack.c.bf16 %v401, %v387
    %v463 = vpack.c.bf16 %v429, %v415
    %v464 = vpack.c.bf16 %v457, %v443
    %465 = vst [vmem:[#allocation10] sm:$0xff] %v459
    %466 = vst [vmem:[#allocation10 + $0x8] sm:$0xff] %v460
    %467 = vst [vmem:[#allocation10 + $0x10] sm:$0xff] %v461
    %468 = vst [vmem:[#allocation10 + $0x18] sm:$0xff] %v462
    %469 = vst [vmem:[#allocation10 + $0x20] sm:$0xff] %v463
    %470 = vst [vmem:[#allocation10 + $0x28] sm:$0xff] %v464
    // Predicated region
    $region46: #{tpu_custom_call.1} parent=1 // pred_check
      _
    $region47: #{tpu_custom_call.1} parent=1 // pred_check_branch
      %472 = sbr.rel (0) target = $region49
    $region48: #{tpu_custom_call.1} parent=1 // pred_region
      %474 = vsyncadd [#allocation4], 0
      %s475 = sshll.u32 [#allocation10], 4
      %s476 = int_to_ptr.vmem [resolvable:$true] %s475
      %s477 = sshll.u32 %s7, 4
      %s478 = int_to_ptr.hbm [resolvable:$true] %s477
      %483 = dma.vmem_to_hbm [thread:$0]  %s476, 768, %s478, [#allocation4], 384, 384, 24
    $region49: #{tpu_custom_call.1} parent=1 // pred_fallthru
      _
    // Predicated region
    $region50: #{tpu_custom_call.1} parent=1 // pred_check
      _
    $region51: #{tpu_custom_call.1} parent=1 // pred_check_branch
      %485 = sbr.rel (0) target = $region53
    $region52: #{tpu_custom_call.1} parent=1 // pred_region
      %487 = dma.done [#allocation4], 768
    $region53: #{tpu_custom_call.1} parent=1 // pred_fallthru
      _
    %488 = vsyncpa [#allocation3], 1
    %489 = vsyncpa [#allocation6], 1
    %490 = vsyncpa [#allocation9], 1
    %491 = vsyncpa [#allocation4], 1

// kernel: tpu_custom_call.1
$region0: #{tpu_custom_call.1}
  #allocation0 [shape = 'u32[]', space=smem, size = 0x4, offset = 0x4, fixed_abs, tag = 'smem constant byte address 0x4 - core index']
  #allocation1 [shape = 'u32[72,128]{1,0:T(1,128)}', space=vmem, size = 0x9000, scoped, tag = 'internal scratch']
  %s0 = inlined_call_operand.hbm [shape: bf16[16,32], index: 0, kind: input, shape index: {}]
  %s1 = inlined_call_operand.hbm [shape: bf16[32,32], index: 1, kind: input, shape index: {}]
  %s2 = inlined_call_operand.vmem [shape: f32[1,32], index: 2, kind: input, shape index: {}]
  %s3 = inlined_call_operand.vmem [shape: f32[1,32], index: 3, kind: input, shape index: {}]
  %s4 = inlined_call_operand.vmem [shape: f32[1,32], index: 4, kind: input, shape index: {}]
  %s5 = inlined_call_operand.hbm [shape: bf16[32,768], index: 5, kind: input, shape index: {}]
  %s6 = inlined_call_operand.hbm [shape: f32[1,768], index: 6, kind: input, shape index: {}]
  %s7 = inlined_call_operand.hbm [shape: bf16[16,768], index: 7, kind: output, shape index: {}]
  %s8 = sld [smem:[#allocation0]]
  $region54: #{tpu_custom_call.1} parent=0
    _
  %s10 = ssub.s32 1, %s8
  %s11 = scalar_select 0, %s10, %s8
  $region1: #{tpu_custom_call.1} parent=0
    #allocation2 [shape = 'u8[4096]{0}', space=vmem, size = 0x1000, scoped, tag = 'input window, operand 0, single buffered']
    #allocation3 [shape = 's32[1]{0}', space=sflag, size = 0x4, scoped, tag = 'scoped memory for tpu_custom_call.1']
    #allocation4 [shape = 's32[1]{0}', space=sflag, size = 0x4, scoped, tag = 'scoped memory for tpu_custom_call.1']
    #allocation5 [shape = 'u8[8192]{0}', space=vmem, size = 0x2000, scoped, tag = 'input window, operand 1, single buffered']
    #allocation6 [shape = 's32[1]{0}', space=sflag, size = 0x4, scoped, tag = 'scoped memory for tpu_custom_call.1']
    #allocation7 [shape = 'u8[49152]{0}', space=vmem, size = 0xc000, scoped, tag = 'input window, operand 5, single buffered']
    #allocation8 [shape = 'u8[3072]{0}', space=vmem, size = 0xc00, scoped, tag = 'input window, operand 6, single buffered']
    #allocation9 [shape = 's32[1]{0}', space=sflag, size = 0x4, scoped, tag = 'scoped memory for tpu_custom_call.1']
    #allocation10 [shape = 'u8[24576]{0}', space=vmem, size = 0x6000, scoped, tag = 'output window, operand 0, single buffered']
    %12 = vsyncpa [#allocation3], 0
    %13 = vsyncpa [#allocation6], 0
    %14 = vsyncpa [#allocation9], 0
    %15 = vsyncpa [#allocation4], 0
    // Predicated region
    $region2: #{tpu_custom_call.1} parent=1 // pred_check
      _
    $region3: #{tpu_custom_call.1} parent=1 // pred_check_branch
      %17 = sbr.rel (0) target = $region5
    $region4: #{tpu_custom_call.1} parent=1 // pred_region
      %19 = vsyncadd [#allocation3], 0
      %s20 = sshll.u32 %s0, 4
      %s21 = int_to_ptr.hbm [resolvable:$true] %s20
      %s22 = sshll.u32 [#allocation2], 4
      %s23 = int_to_ptr.vmem [resolvable:$true] %s22
      %28 = dma.hbm_to_vmem [thread:$0]  %s21, 128, %s23, [#allocation3], 64, 64, 4
    $region5: #{tpu_custom_call.1} parent=1 // pred_fallthru
      _
    // Predicated region
    $region6: #{tpu_custom_call.1} parent=1 // pred_check
      _
    $region7: #{tpu_custom_call.1} parent=1 // pred_check_branch
      %30 = sbr.rel (0) target = $region9
    $region8: #{tpu_custom_call.1} parent=1 // pred_region
      %32 = vsyncadd [#allocation6], 0
      %s33 = sshll.u32 %s1, 4
      %s34 = int_to_ptr.hbm [resolvable:$true] %s33
      %s35 = sshll.u32 [#allocation5], 4
      %s36 = int_to_ptr.vmem [resolvable:$true] %s35
      %41 = dma.hbm_to_vmem [thread:$0]  %s34, 256, %s36, [#allocation6], 64, 64, 4
    $region9: #{tpu_custom_call.1} parent=1 // pred_fallthru
      _
    // Predicated region
    $region10: #{tpu_custom_call.1} parent=1 // pred_check
      _
    $region11: #{tpu_custom_call.1} parent=1 // pred_check_branch
      %43 = sbr.rel (0) target = $region13
    $region12: #{tpu_custom_call.1} parent=1 // pred_region
      _
    $region13: #{tpu_custom_call.1} parent=1 // pred_fallthru
      _
    // Predicated region
    $region14: #{tpu_custom_call.1} parent=1 // pred_check
      _
    $region15: #{tpu_custom_call.1} parent=1 // pred_check_branch
      %45 = sbr.rel (0) target = $region17
    $region16: #{tpu_custom_call.1} parent=1 // pred_region
      _
    $region17: #{tpu_custom_call.1} parent=1 // pred_fallthru
      _
    // Predicated region
    $region18: #{tpu_custom_call.1} parent=1 // pred_check
      _
    $region19: #{tpu_custom_call.1} parent=1 // pred_check_branch
      %47 = sbr.rel (0) target = $region21
    $region20: #{tpu_custom_call.1} parent=1 // pred_region
      _
    $region21: #{tpu_custom_call.1} parent=1 // pred_fallthru
      _
    // Predicated region
    $region22: #{tpu_custom_call.1} parent=1 // pred_check
      _
    $region23: #{tpu_custom_call.1} parent=1 // pred_check_branch
      %49 = sbr.rel (0) target = $region25
    $region24: #{tpu_custom_call.1} parent=1 // pred_region
      %51 = vsyncadd [#allocation6], 0
      %s52 = sshll.u32 %s5, 4
      %s53 = int_to_ptr.hbm [resolvable:$true] %s52
      %s54 = sshll.u32 [#allocation7], 4
      %s55 = int_to_ptr.vmem [resolvable:$true] %s54
      %60 = dma.hbm_to_vmem [thread:$0]  %s53, 1536, %s55, [#allocation6], 384, 384, 24
    $region25: #{tpu_custom_call.1} parent=1 // pred_fallthru
      _
    // Predicated region
    $region26: #{tpu_custom_call.1} parent=1 // pred_check
      _
    $region27: #{tpu_custom_call.1} parent=1 // pred_check_branch
      %62 = sbr.rel (0) target = $region29
    $region28: #{tpu_custom_call.1} parent=1 // pred_region
      %64 = vsyncadd [#allocation9], 0
      %s66 = sshll.u32 %s6, 4
      %s67 = int_to_ptr.hbm [resolvable:$true] %s66
      %s68 = sshll.u32 [#allocation8], 4
      %s69 = int_to_ptr.vmem [resolvable:$true] %s68
      %71 = dma.hbm_to_vmem [thread:$0]  %s67, 96, %s69, [#allocation9]
    $region29: #{tpu_custom_call.1} parent=1 // pred_fallthru
      _
    // Predicated region
    $region30: #{tpu_custom_call.1} parent=1 // pred_check
      _
    $region31: #{tpu_custom_call.1} parent=1 // pred_check_branch
      %73 = sbr.rel (0) target = $region33
    $region32: #{tpu_custom_call.1} parent=1 // pred_region
      %75 = dma.done [#allocation3], 128
    $region33: #{tpu_custom_call.1} parent=1 // pred_fallthru
      _
    // Predicated region
    $region34: #{tpu_custom_call.1} parent=1 // pred_check
      _
    $region35: #{tpu_custom_call.1} parent=1 // pred_check_branch
      %77 = sbr.rel (0) target = $region37
    $region36: #{tpu_custom_call.1} parent=1 // pred_region
      %79 = dma.done [#allocation6], 256
    $region37: #{tpu_custom_call.1} parent=1 // pred_fallthru
      _
    // Predicated region
    $region38: #{tpu_custom_call.1} parent=1 // pred_check
      _
    $region39: #{tpu_custom_call.1} parent=1 // pred_check_branch
      %81 = sbr.rel (0) target = $region41
    $region40: #{tpu_custom_call.1} parent=1 // pred_region
      %83 = dma.done [#allocation6], 1536
    $region41: #{tpu_custom_call.1} parent=1 // pred_fallthru
      _
    // Predicated region
    $region42: #{tpu_custom_call.1} parent=1 // pred_check
      _
    $region43: #{tpu_custom_call.1} parent=1 // pred_check_branch
      %85 = sbr.rel (0) target = $region45
    $region44: #{tpu_custom_call.1} parent=1 // pred_region
      %87 = dma.done [#allocation9], 96
    $region45: #{tpu_custom_call.1} parent=1 // pred_fallthru
      _
    %v89 = vld [vmem:[#allocation2] sm:$0xf]
    %v90 = vld [vmem:[#allocation2 + $0x4] sm:$0xf]
    %v91 = vld [vmem:[#allocation5] sm:$0xf]
    %v92 = vld [vmem:[#allocation5 + $0x4] sm:$0xf]
    %v93 = vld [vmem:[#allocation5 + $0x8] sm:$0xf]
    %v94 = vld [vmem:[#allocation5 + $0xc] sm:$0xf]
    %v95 = vld [vmem:[%s2] sm:$0x1]
    %v97 = vperm.slane %v95, 0
    %v101 = vunpack.c.l.b16 %v89
    %v102 = vunpack.c.l.b16 %v90
    %v103 = vpack.c.b16 %v102, %v101
    %v108 = vunpack.c.l.b16 %v91
    %v109 = vunpack.c.l.b16 %v92
    %v110 = vunpack.c.l.b16 %v93
    %v111 = vunpack.c.l.b16 %v94
    %v112 = vpack.c.b16 %v109, %v108
    %v113 = vpack.c.b16 %v111, %v110
    %vm116 = vcmask 261120
    %v118 = vsel %vm116, %v103, 0
    %120 = vmatpush.bf16.msra.mxu0 0
    %121 = vmatpush.bf16.msra.mxu0 0
    %122 = vmatpush.bf16.msra.mxu0 0
    %123 = vmatpush.bf16.msra.mxu0 0
    %124 = vmatpush.bf16.msra.mxu0 0
    %125 = vmatpush.bf16.msra.mxu0 0
    %126 = vmatpush.bf16.msra.mxu0 %v113
    %127 = vmatpush.bf16.msra.mxu0 %v112
    %128 = vmatmul.bf16.gmra.mxu0 %v118
    %v129 = vpop.f32.mrf.mxu0
    %v130 = vadd.f32 %v97, %v129
    %v131 = vpop.f32.mrf.mxu0
    %v132 = vadd.f32 %v97, %v131
    %133 = vdwg.mxu0
    %v134 = vmul.f32 %v130, 0.5
    %v135 = vmul.f32 %v132, 0.5
    %v136 = vmul.f32 %v130, 0.70710677
    %v137 = vmul.f32 %v132, 0.70710677
    %v138 = vmul.f32 %v136, %v136
    %v139 = vmin.f32 16.0, %v138
    %v140 = vmul.f32 %v139, 2.1237322e-06
    %v141 = vadd.f32 %v140, 0.00028619796
    %v142 = vmul.f32 %v139, %v141
    %v143 = vadd.f32 %v142, 0.0036580483
    %v144 = vmul.f32 %v139, %v143
    %v145 = vadd.f32 %v144, 0.05243302
    %v146 = vmul.f32 %v139, %v145
    %v147 = vadd.f32 %v146, 0.18741608
    %v148 = vmul.f32 %v139, %v147
    %v149 = vadd.f32 %v148, 1.1283791
    %v150 = vmul.f32 %v136, %v149
    %v151 = vmul.f32 %v139, 3.8918573e-05
    %v152 = vadd.f32 %v151, 0.001143296
    %v153 = vmul.f32 %v139, %v152
    %v154 = vadd.f32 %v153, 0.014752088
    %v155 = vmul.f32 %v139, %v154
    %v156 = vadd.f32 %v155, 0.112945676
    %v157 = vmul.f32 %v139, %v156
    %v158 = vadd.f32 %v157, 0.4994258
    %v159 = vmul.f32 %v139, %v158
    %v160 = vadd.f32 %v159, 1.0
    %v161 = vrcp.pop %v160
    %v162 = vmul.f32 %v160, %v161
    %v163 = vsub.f32 1.0, %v162
    %v164 = vmul.f32 %v161, %v163
    %v165 = vadd.f32 %v161, %v164
    %vm166 = vweird.f32 %v160
    %vm167 = vweird.f32 %v161
    %vm168 = vmor %vm166, %vm167
    %v169 = vsel %vm168, %v161, %v165
    %v170 = vand.u32 2147483647, %v160
    %vm171 = vcmp.eq.f32.partialorder %v170, 8.507059e+37
    %v172 = vand.u32 %v160, 2147483648
    %v173 = vor.u32 1.1754944e-38, %v172
    %v174 = vsel %vm171, %v173, %v169
    %v175 = vmul.f32 %v150, %v174
    %v176 = vmin.f32 %v175, 1.0
    %v177 = vmax.f32 %v176, -1.0
    %v178 = vmul.f32 %v137, %v137
    %v179 = vmin.f32 16.0, %v178
    %v180 = vmul.f32 %v179, 2.1237322e-06
    %v181 = vadd.f32 %v180, 0.00028619796
    %v182 = vmul.f32 %v179, %v181
    %v183 = vadd.f32 %v182, 0.0036580483
    %v184 = vmul.f32 %v179, %v183
    %v185 = vadd.f32 %v184, 0.05243302
    %v186 = vmul.f32 %v179, %v185
    %v187 = vadd.f32 %v186, 0.18741608
    %v188 = vmul.f32 %v179, %v187
    %v189 = vadd.f32 %v188, 1.1283791
    %v190 = vmul.f32 %v137, %v189
    %v191 = vmul.f32 %v179, 3.8918573e-05
    %v192 = vadd.f32 %v191, 0.001143296
    %v193 = vmul.f32 %v179, %v192
    %v194 = vadd.f32 %v193, 0.014752088
    %v195 = vmul.f32 %v179, %v194
    %v196 = vadd.f32 %v195, 0.112945676
    %v197 = vmul.f32 %v179, %v196
    %v198 = vadd.f32 %v197, 0.4994258
    %v199 = vmul.f32 %v179, %v198
    %v200 = vadd.f32 %v199, 1.0
    %v201 = vrcp.pop %v200
    %v202 = vmul.f32 %v200, %v201
    %v203 = vsub.f32 1.0, %v202
    %v204 = vmul.f32 %v201, %v203
    %v205 = vadd.f32 %v201, %v204
    %vm206 = vweird.f32 %v200
    %vm207 = vweird.f32 %v201
    %vm208 = vmor %vm206, %vm207
    %v209 = vsel %vm208, %v201, %v205
    %v210 = vand.u32 2147483647, %v200
    %vm211 = vcmp.eq.f32.partialorder %v210, 8.507059e+37
    %v212 = vand.u32 %v200, 2147483648
    %v213 = vor.u32 1.1754944e-38, %v212
    %v214 = vsel %vm211, %v213, %v209
    %v215 = vmul.f32 %v190, %v214
    %v216 = vmin.f32 %v215, 1.0
    %v217 = vmax.f32 %v216, -1.0
    %v218 = vadd.f32 %v177, 1.0
    %v219 = vadd.f32 %v217, 1.0
    %v220 = vmul.f32 %v134, %v218
    %v221 = vmul.f32 %v135, %v219
    %v222 = vsel %vm116, %v220, 0.0
    %223 = vadd.xlane.f32.xlu0 %v222
    %v224 = vpop.xlane.xlu0 %223
    %v225 = vsel %vm116, %v221, 0.0
    %226 = vadd.xlane.f32.xlu0 %v225
    %v227 = vpop.xlane.xlu0 %226
    %v228 = vrcp.pop 32.0
    %v229 = vmul.f32 32.0, %v228
    %v230 = vsub.f32 1.0, %v229
    %v231 = vmul.f32 %v228, %v230
    %v232 = vadd.f32 %v228, %v231
    %vm233 = vweird.f32 %v228
    %v234 = vsel %vm233, %v228, %v232
    %v235 = vmul.f32 %v224, %v234
    %v236 = vmul.f32 %v227, %v234
    %v237 = vsub.f32 %v220, %v235
    %v238 = vsub.f32 %v221, %v236
    %v239 = vmul.f32 %v237, %v237
    %v240 = vmul.f32 %v238, %v238
    %v241 = vsel %vm116, %v239, 0.0
    %242 = vadd.xlane.f32.xlu0 %v241
    %v243 = vpop.xlane.xlu0 %242
    %v244 = vsel %vm116, %v240, 0.0
    %245 = vadd.xlane.f32.xlu0 %v244
    %v246 = vpop.xlane.xlu0 %245
    %v247 = vmul.f32 %v243, %v234
    %v248 = vmul.f32 %v246, %v234
    %v249 = vadd.f32 %v247, 1e-12
    %v250 = vadd.f32 %v248, 1e-12
    %v251 = vrsqrt.pop %v249
    %v252 = vmul.f32 %v251, %v249
    %v253 = vmul.f32 %v252, %v251
    %v254 = vmul.f32 0.5, %v253
    %v255 = vsub.f32 1.5, %v254
    %v256 = vmul.f32 %v251, %v255
    %vm257 = vweird.f32 %v249
    %vm258 = vweird.f32 %v251
    %vm259 = vmor %vm257, %vm258
    %v260 = vsel %vm259, %v251, %v256
    %v261 = vrsqrt.pop %v250
    %v262 = vmul.f32 %v261, %v250
    %v263 = vmul.f32 %v262, %v261
    %v264 = vmul.f32 0.5, %v263
    %v265 = vsub.f32 1.5, %v264
    %v266 = vmul.f32 %v261, %v265
    %vm267 = vweird.f32 %v250
    %vm268 = vweird.f32 %v261
    %vm269 = vmor %vm267, %vm268
    %v270 = vsel %vm269, %v261, %v266
    %v271 = vmul.f32 %v237, %v260
    %v272 = vmul.f32 %v238, %v270
    %v273 = vld [vmem:[%s3] sm:$0x1]
    %v275 = vperm.slane %v273, 0
    %v277 = vmul.f32 %v271, %v275
    %v278 = vmul.f32 %v272, %v275
    %v279 = vld [vmem:[%s4] sm:$0x1]
    %v281 = vperm.slane %v279, 0
    %v283 = vadd.f32 %v277, %v281
    %v284 = vadd.f32 %v278, %v281
    %v285 = vpack.c.bf16 %v284, %v283
    %v286 = vld [vmem:[#allocation7] sm:$0xff]
    %v287 = vld [vmem:[#allocation7 + $0x8] sm:$0xff]
    %v288 = vld [vmem:[#allocation7 + $0x10] sm:$0xff]
    %v289 = vld [vmem:[#allocation7 + $0x18] sm:$0xff]
    %v290 = vld [vmem:[#allocation7 + $0x20] sm:$0xff]
    %v291 = vld [vmem:[#allocation7 + $0x28] sm:$0xff]
    %v292 = vld [vmem:[#allocation7 + $0x30] sm:$0xff]
    %v293 = vld [vmem:[#allocation7 + $0x38] sm:$0xff]
    %v294 = vld [vmem:[#allocation7 + $0x40] sm:$0xff]
    %v295 = vld [vmem:[#allocation7 + $0x48] sm:$0xff]
    %v296 = vld [vmem:[#allocation7 + $0x50] sm:$0xff]
    %v297 = vld [vmem:[#allocation7 + $0x58] sm:$0xff]
    %v298 = vld [vmem:[#allocation8] sm:$0x3f]
    %v300 = vperm.slane %v298, 0
    %v301 = vperm.slane %v298, 1
    %v302 = vperm.slane %v298, 2
    %v303 = vperm.slane %v298, 3
    %v304 = vperm.slane %v298, 4
    %v305 = vperm.slane %v298, 5
    %v324 = vunpack.c.l.b16 %v286
    %v325 = vunpack.c.h.b16 %v286
    %v326 = vunpack.c.l.b16 %v287
    %v327 = vunpack.c.h.b16 %v287
    %v328 = vunpack.c.l.b16 %v288
    %v329 = vunpack.c.h.b16 %v288
    %v330 = vunpack.c.l.b16 %v289
    %v331 = vunpack.c.h.b16 %v289
    %v332 = vunpack.c.l.b16 %v290
    %v333 = vunpack.c.h.b16 %v290
    %v334 = vunpack.c.l.b16 %v291
    %v335 = vunpack.c.h.b16 %v291
    %v336 = vunpack.c.l.b16 %v292
    %v337 = vunpack.c.h.b16 %v292
    %v338 = vunpack.c.l.b16 %v293
    %v339 = vunpack.c.h.b16 %v293
    %v340 = vunpack.c.l.b16 %v294
    %v341 = vunpack.c.h.b16 %v294
    %v342 = vunpack.c.l.b16 %v295
    %v343 = vunpack.c.h.b16 %v295
    %v344 = vunpack.c.l.b16 %v296
    %v345 = vunpack.c.h.b16 %v296
    %v346 = vunpack.c.l.b16 %v297
    %v347 = vunpack.c.h.b16 %v297
    %v348 = vpack.c.b16 %v330, %v324
    %v349 = vpack.c.b16 %v331, %v325
    %v350 = vpack.c.b16 %v332, %v326
    %v351 = vpack.c.b16 %v333, %v327
    %v352 = vpack.c.b16 %v334, %v328
    %v353 = vpack.c.b16 %v335, %v329
    %v354 = vpack.c.b16 %v342, %v336
    %v355 = vpack.c.b16 %v343, %v337
    %v356 = vpack.c.b16 %v344, %v338
    %v357 = vpack.c.b16 %v345, %v339
    %v358 = vpack.c.b16 %v346, %v340
    %v359 = vpack.c.b16 %v347, %v341
    %v373 = vsel %vm116, %v285, 0
    %375 = vmatpush.bf16.msra.mxu0 0
    %376 = vmatpush.bf16.msra.mxu0 0
    %377 = vmatpush.bf16.msra.mxu0 0
    %378 = vmatpush.bf16.msra.mxu0 0
    %379 = vmatpush.bf16.msra.mxu0 0
    %380 = vmatpush.bf16.msra.mxu0 0
    %381 = vmatpush.bf16.msra.mxu0 %v354
    %382 = vmatpush.bf16.msra.mxu0 %v348
    %383 = vmatmul.bf16.gmra.mxu0 %v373
    %v384 = vpop.f32.mrf.mxu0
    %v385 = vadd.f32 %v300, %v384
    %v386 = vpop.f32.mrf.mxu0
    %v387 = vadd.f32 %v300, %v386
    %388 = vdwg.mxu0
    %389 = vmatpush.bf16.msra.mxu0 0
    %390 = vmatpush.bf16.msra.mxu0 0
    %391 = vmatpush.bf16.msra.mxu0 0
    %392 = vmatpush.bf16.msra.mxu0 0
    %393 = vmatpush.bf16.msra.mxu0 0
    %394 = vmatpush.bf16.msra.mxu0 0
    %395 = vmatpush.bf16.msra.mxu0 %v355
    %396 = vmatpush.bf16.msra.mxu0 %v349
    %397 = vmatmul.bf16.gmra.mxu0 %v373
    %v398 = vpop.f32.mrf.mxu0
    %v399 = vadd.f32 %v301, %v398
    %v400 = vpop.f32.mrf.mxu0
    %v401 = vadd.f32 %v301, %v400
    %402 = vdwg.mxu0
    %403 = vmatpush.bf16.msra.mxu0 0
    %404 = vmatpush.bf16.msra.mxu0 0
    %405 = vmatpush.bf16.msra.mxu0 0
    %406 = vmatpush.bf16.msra.mxu0 0
    %407 = vmatpush.bf16.msra.mxu0 0
    %408 = vmatpush.bf16.msra.mxu0 0
    %409 = vmatpush.bf16.msra.mxu0 %v356
    %410 = vmatpush.bf16.msra.mxu0 %v350
    %411 = vmatmul.bf16.gmra.mxu0 %v373
    %v412 = vpop.f32.mrf.mxu0
    %v413 = vadd.f32 %v302, %v412
    %v414 = vpop.f32.mrf.mxu0
    %v415 = vadd.f32 %v302, %v414
    %416 = vdwg.mxu0
    %417 = vmatpush.bf16.msra.mxu0 0
    %418 = vmatpush.bf16.msra.mxu0 0
    %419 = vmatpush.bf16.msra.mxu0 0
    %420 = vmatpush.bf16.msra.mxu0 0
    %421 = vmatpush.bf16.msra.mxu0 0
    %422 = vmatpush.bf16.msra.mxu0 0
    %423 = vmatpush.bf16.msra.mxu0 %v357
    %424 = vmatpush.bf16.msra.mxu0 %v351
    %425 = vmatmul.bf16.gmra.mxu0 %v373
    %v426 = vpop.f32.mrf.mxu0
    %v427 = vadd.f32 %v303, %v426
    %v428 = vpop.f32.mrf.mxu0
    %v429 = vadd.f32 %v303, %v428
    %430 = vdwg.mxu0
    %431 = vmatpush.bf16.msra.mxu0 0
    %432 = vmatpush.bf16.msra.mxu0 0
    %433 = vmatpush.bf16.msra.mxu0 0
    %434 = vmatpush.bf16.msra.mxu0 0
    %435 = vmatpush.bf16.msra.mxu0 0
    %436 = vmatpush.bf16.msra.mxu0 0
    %437 = vmatpush.bf16.msra.mxu0 %v358
    %438 = vmatpush.bf16.msra.mxu0 %v352
    %439 = vmatmul.bf16.gmra.mxu0 %v373
    %v440 = vpop.f32.mrf.mxu0
    %v441 = vadd.f32 %v304, %v440
    %v442 = vpop.f32.mrf.mxu0
    %v443 = vadd.f32 %v304, %v442
    %444 = vdwg.mxu0
    %445 = vmatpush.bf16.msra.mxu0 0
    %446 = vmatpush.bf16.msra.mxu0 0
    %447 = vmatpush.bf16.msra.mxu0 0
    %448 = vmatpush.bf16.msra.mxu0 0
    %449 = vmatpush.bf16.msra.mxu0 0
    %450 = vmatpush.bf16.msra.mxu0 0
    %451 = vmatpush.bf16.msra.mxu0 %v359
    %452 = vmatpush.bf16.msra.mxu0 %v353
    %453 = vmatmul.bf16.gmra.mxu0 %v373
    %v454 = vpop.f32.mrf.mxu0
    %v455 = vadd.f32 %v305, %v454
    %v456 = vpop.f32.mrf.mxu0
    %v457 = vadd.f32 %v305, %v456
    %458 = vdwg.mxu0
    %v459 = vpack.c.bf16 %v399, %v385
    %v460 = vpack.c.bf16 %v427, %v413
    %v461 = vpack.c.bf16 %v455, %v441
    %v462 = vpack.c.bf16 %v401, %v387
    %v463 = vpack.c.bf16 %v429, %v415
    %v464 = vpack.c.bf16 %v457, %v443
    %465 = vst [vmem:[#allocation10] sm:$0xff] %v459
    %466 = vst [vmem:[#allocation10 + $0x8] sm:$0xff] %v460
    %467 = vst [vmem:[#allocation10 + $0x10] sm:$0xff] %v461
    %468 = vst [vmem:[#allocation10 + $0x18] sm:$0xff] %v462
    %469 = vst [vmem:[#allocation10 + $0x20] sm:$0xff] %v463
    %470 = vst [vmem:[#allocation10 + $0x28] sm:$0xff] %v464
    // Predicated region
    $region46: #{tpu_custom_call.1} parent=1 // pred_check
      _
    $region47: #{tpu_custom_call.1} parent=1 // pred_check_branch
      %472 = sbr.rel (0) target = $region49
    $region48: #{tpu_custom_call.1} parent=1 // pred_region
      %474 = vsyncadd [#allocation4], 0
      %s475 = sshll.u32 [#allocation10], 4
      %s476 = int_to_ptr.vmem [resolvable:$true] %s475
      %s477 = sshll.u32 %s7, 4
      %s478 = int_to_ptr.hbm [resolvable:$true] %s477
      %483 = dma.vmem_to_hbm [thread:$0]  %s476, 768, %s478, [#allocation4], 384, 384, 24
    $region49: #{tpu_custom_call.1} parent=1 // pred_fallthru
      _
    // Predicated region
    $region50: #{tpu_custom_call.1} parent=1 // pred_check
      _
    $region51: #{tpu_custom_call.1} parent=1 // pred_check_branch
      %485 = sbr.rel (0) target = $region53
    $region52: #{tpu_custom_call.1} parent=1 // pred_region
      %487 = dma.done [#allocation4], 768
    $region53: #{tpu_custom_call.1} parent=1 // pred_fallthru
      _
    %488 = vsyncpa [#allocation3], 1
    %489 = vsyncpa [#allocation6], 1
    %490 = vsyncpa [#allocation9], 1
    %491 = vsyncpa [#allocation4], 1

</llo_original>
